<compile_context>
chip_gen: v5e
topology: v5e:2x2
jax: 0.10.0
libtpu: 0.0.40
codegen_flags: <defaults>
</compile_context>

<pallas_src>
import functools

import numpy as np

import jax
import jax.numpy as jnp
from jax import lax
from jax.experimental import pallas as pl
from jax.experimental.pallas import tpu as pltpu


# ---------------------------------------------------------------------------
# Roll-convention probe: pltpu.roll is expected to follow np.roll semantics
# (out[i] = in[i - shift]).  Cached so it costs one tiny compile per process.
# ---------------------------------------------------------------------------
@functools.lru_cache(maxsize=None)
def detect_roll_sign():
    x = jnp.broadcast_to(jnp.arange(128.0, dtype=jnp.float32)[None, :], (8, 128))

    def k(x_ref, o_ref):
        o_ref[...] = pltpu.roll(x_ref[...], 1, 1)

    y = pl.pallas_call(k, out_shape=jax.ShapeDtypeStruct((8, 128), jnp.float32))(x)
    row = np.asarray(y)[0]
    base = np.arange(128.0, dtype=np.float32)
    if np.array_equal(row, np.roll(base, 1)):
        return -1            # np.roll semantics: out[i] = in[i - shift]
    if np.array_equal(row, np.roll(base, -1)):
        return +1            # opposite convention: out[i] = in[i + shift]
    raise RuntimeError("unexpected pltpu.roll semantics")


def _num_tensorcores():
    """2 on v7x (2 TensorCores / chip), else 1; purely a perf hint."""
    try:
        kind = jax.devices()[0].device_kind.lower()
    except Exception:
        return 1
    return 2 if "v7" in kind else 1


# ---------------------------------------------------------------------------
# Fused forward kernel: per grid step (= one chunk of Bc batch elements,
# batch folded into the lane axis).
#   - im2col: 9 lane-rolled + border-masked copies of the channel-stacked
#     input, concatenated along K
#   - ONE MXU matmul [2*HID, 9*2C] @ [9*2C, Bc*HW] for both convs
#   - bias + ReLU on lane-dense activations
#   - per batch element: FC heads as [2*HID, HW] @ [HW, 2*HID*9] + diagonal
#     select matmul + sublane reduce; one lane-dense [1,128] row written out
# ---------------------------------------------------------------------------
def _combined_fwd_kernel(x_ref, mask_ref, wconv_ref, bconv_ref,
                         wfc_ref, dsel_ref, esel_ref, bfc_ref, out_ref,
                         *, hw, width, bc, roll_sign):
    f32 = jnp.float32
    prec = lax.Precision.HIGHEST
    lanes = bc * hw
    xm = x_ref[0]                                    # [2C, Bc*HW]  (src | canv)

    # ---- im2col: 9 shifted + zero-padded-border copies stacked along K ----
    pieces = []
    for t in range(9):                               # tap t = ky*3 + kx
        dy, dx = t // 3 - 1, t % 3 - 1
        d = dy * width + dx                          # flat lane offset of tap
        if d == 0:
            pieces.append(xm)
        else:
            # out[p] needs in[p + d]; np.roll semantics -> roll by -d.  The
            # per-image masks zero the padding border AND any wrap-around /
            # cross-image reads introduced by rolling the batch-folded lanes.
            shift = (roll_sign * d) % lanes
            pieces.append(pltpu.roll(xm, shift, 1) * mask_ref[t])
    s = jnp.concatenate(pieces, axis=0)              # [9*2C, Bc*HW]

    # ---- both convs fused into one MXU push --------------------------------
    conv = jnp.dot(wconv_ref[...], s, precision=prec, preferred_element_type=f32)
    h = jnp.maximum(conv + bconv_ref[...], 0.0)      # [2*HID, Bc*HW]
    # rows 0..HID-1 = mov activations, HID..2*HID-1 = cat activations (NCHW)

    # ---- FC heads per batch element: 2 pushes + diag-select + reduce ------
    for b in range(bc):
        h_b = h[:, b * hw:(b + 1) * hw]              # [2*HID, HW]
        t_mat = jnp.dot(h_b, wfc_ref[...], precision=prec,
                        preferred_element_type=f32)  # [2*HID, 2*HID*n_tot]
        g_mat = jnp.dot(t_mat * dsel_ref[...], esel_ref[...], precision=prec,
                        preferred_element_type=f32)  # [2*HID, 128]
        row = jnp.sum(g_mat, axis=0, keepdims=True) + bfc_ref[...]   # [1, 128]
        out_ref[:, b:b + 1, :] = row.reshape(1, 1, 128)


# ---------------------------------------------------------------------------
# Wrapper: one pallas_call for the whole forward
# ---------------------------------------------------------------------------
def combined_network_forward(packed, src, canv, *, n_mov, n_cat,
                             batch_chunks=1, roll_sign=-1):
    """Pallas equivalent of CombinedNetworkTorch.forward -> (mov_out, cat_out)."""
    B, C, H, W = src.shape
    hw = H * W
    n_tot = n_mov + n_cat
    assert hw % 128 == 0, "roll-based im2col needs H*W to be a multiple of 128"
    assert n_tot <= 128
    G = batch_chunks if (batch_chunks > 0 and B % batch_chunks == 0) else 1
    bc = B // G
    lanes = bc * hw
    hid2 = packed["w_conv"].shape[0]

    # [B,C,H,W] -> [G, C, Bc*HW]: channels in sublanes, (local batch, pixel)
    # folded into the lane axis.
    x = jnp.concatenate([src, canv], axis=1).astype(jnp.float32)     # [B,2C,H,W]
    x = x.reshape(G, bc, 2 * C, hw).transpose(0, 2, 1, 3).reshape(G, 2 * C, lanes)

    masks = packed["masks"] if bc == 1 else jnp.tile(packed["masks"], (1, 1, bc))

    kernel = functools.partial(_combined_fwd_kernel, hw=hw, width=W, bc=bc,
                               roll_sign=roll_sign)

    batch_map = lambda g: (g, 0, 0)
    c3 = lambda g: (0, 0, 0)
    c2 = lambda g: (0, 0)

    out = pl.pallas_call(
        kernel,
        grid=(G,),
        in_specs=[
            pl.BlockSpec((1, 2 * C, lanes), batch_map),          # input chunk
            pl.BlockSpec((9, 1, lanes), c3),                     # tap border masks
            pl.BlockSpec((hid2, 9 * 2 * C), c2),                 # fused conv w
            pl.BlockSpec((hid2, 1), c2),                         # fused conv b
            pl.BlockSpec((hw, hid2 * n_tot), c2),                # fused fc w
            pl.BlockSpec((hid2, hid2 * n_tot), c2),              # diag selector
            pl.BlockSpec((hid2 * n_tot, 128), c2),               # column selector
            pl.BlockSpec((1, 128), c2),                          # fused fc bias
        ],
        out_specs=pl.BlockSpec((1, bc, 128), batch_map),
        out_shape=jax.ShapeDtypeStruct((G, bc, 128), jnp.float32),
        compiler_params=pltpu.CompilerParams(dimension_semantics=("parallel",)),
    )(x, masks, packed["w_conv"], packed["b_conv"],
      packed["w_fc2"], packed["d_sel"], packed["e_sel"], packed["b_fc"])

    out = out.reshape(B, 128)                        # lane-dense combined heads
    return out[:, :n_mov], out[:, n_mov:n_tot]
    # TODO(synk): optimise()/make_metrics() are training-time utilities (SGD
    # step, losses, metrics) and are not part of the forward pass; not ported.


# ---------------------------------------------------------------------------
# Parameters: PyTorch layout (init) + one-time kernel re-layout (pack)
# ---------------------------------------------------------------------------
def init_params(key, in_channels=4, hidden_channels=8, H=16, W=16,
                n_mov=4, n_classes=5):
    ks = jax.random.split(key, 8)
    s = 0.05
    return {
        "mov_conv_w": s * jax.random.normal(ks[0], (hidden_channels, 2 * in_channels, 3, 3), jnp.float32),
        "mov_conv_b": s * jax.random.normal(ks[1], (hidden_channels,), jnp.float32),
        "mov_fc_w":   s * jax.random.normal(ks[2], (n_mov, hidden_channels * H * W), jnp.float32),
        "mov_fc_b":   s * jax.random.normal(ks[3], (n_mov,), jnp.float32),
        "cat_conv_w": s * jax.random.normal(ks[4], (hidden_channels, in_channels, 3, 3), jnp.float32),
        "cat_conv_b": s * jax.random.normal(ks[5], (hidden_channels,), jnp.float32),
        "cat_fc_w":   s * jax.random.normal(ks[6], (n_classes, hidden_channels * H * W), jnp.float32),
        "cat_fc_b":   s * jax.random.normal(ks[7], (n_classes,), jnp.float32),
    }


def _tap_masks(H, W):
    """[9, 1, H*W] {0,1} masks implementing the padding=1 zero border."""
    p = np.arange(H * W)
    y, x = p // W, p % W
    rows = []
    for t in range(9):
        dy, dx = t // 3 - 1, t % 3 - 1
        valid = (y + dy >= 0) & (y + dy < H) & (x + dx >= 0) & (x + dx < W)
        rows.append(valid.astype(np.float32))
    return jnp.asarray(np.stack(rows)[:, None, :])


def pack_params(params, H, W):
    """One-time re-layout of PyTorch-layout params into fused kernel layout."""
    hw = H * W
    mov_w, cat_w = params["mov_conv_w"], params["cat_conv_w"]
    hid = mov_w.shape[0]
    cin2 = mov_w.shape[1]                           # 2C (mov conv sees src|canv)
    n_mov = params["mov_fc_w"].shape[0]
    n_cat = params["cat_fc_w"].shape[0]
    n_tot = n_mov + n_cat
    hid2 = 2 * hid

    def taps(w):                                    # [Cout,Cin,3,3] -> [Cout, 9*cin2]
        cout, cin = w.shape[0], w.shape[1]
        t = jnp.transpose(w, (0, 2, 3, 1)).reshape(cout, 9, cin)
        if cin < cin2:                              # cat conv ignores canv channels
            t = jnp.pad(t, ((0, 0), (0, 0), (0, cin2 - cin)))
        return t.reshape(cout, 9 * cin2)

    w_conv = jnp.concatenate([taps(mov_w), taps(cat_w)], axis=0)      # [2*HID, 9*2C]
    b_conv = jnp.concatenate([params["mov_conv_b"], params["cat_conv_b"]]).reshape(-1, 1)

    # Fused FC weight W2[p, r*n_tot + n] = weight(neuron n, conv-row r, pixel p),
    # with mov neurons zero on cat rows and vice versa (NCHW flatten order).
    wm = jnp.transpose(params["mov_fc_w"].reshape(n_mov, hid, hw), (2, 1, 0))
    wc = jnp.transpose(params["cat_fc_w"].reshape(n_cat, hid, hw), (2, 1, 0))
    w_img = jnp.zeros((hw, hid2, n_tot), jnp.float32)
    w_img = w_img.at[:, :hid, :n_mov].set(wm).at[:, hid:, n_mov:].set(wc)
    w_fc2 = w_img.reshape(hw, hid2 * n_tot)

    d_sel = np.zeros((hid2, hid2 * n_tot), np.float32)   # keep only row-r block
    for r in range(hid2):
        d_sel[r, r * n_tot:(r + 1) * n_tot] = 1.0
    e_sel = np.zeros((hid2 * n_tot, 128), np.float32)    # column k -> neuron k%n_tot
    for k in range(hid2 * n_tot):
        e_sel[k, k % n_tot] = 1.0

    b_fc = np.zeros((1, 128), np.float32)                # lane-dense fused bias
    b_fc[0, :n_mov] = np.asarray(params["mov_fc_b"])
    b_fc[0, n_mov:n_tot] = np.asarray(params["cat_fc_b"])

    return {
        "w_conv": w_conv, "b_conv": b_conv,
        "w_fc2": w_fc2,
        "d_sel": jnp.asarray(d_sel), "e_sel": jnp.asarray(e_sel),
        "b_fc": jnp.asarray(b_fc),
        "masks": _tap_masks(H, W),
    }


# ---------------------------------------------------------------------------
# Pure-JAX reference (PyTorch Conv2d/Linear semantics) for self-validation
# ---------------------------------------------------------------------------
def combined_network_forward_ref(params, src, canv):
    prec = lax.Precision.HIGHEST

    def conv3x3_relu(x, w, b):
        y = lax.conv_general_dilated(
            x, w, window_strides=(1, 1), padding=((1, 1), (1, 1)),
            dimension_numbers=("NCHW", "OIHW", "NCHW"), precision=prec)
        return jax.nn.relu(y + b[None, :, None, None])

    B = src.shape[0]
    hm = conv3x3_relu(jnp.concatenate([src, canv], axis=1),
                      params["mov_conv_w"], params["mov_conv_b"])
    hc = conv3x3_relu(src, params["cat_conv_w"], params["cat_conv_b"])
    mov = jnp.dot(hm.reshape(B, -1), params["mov_fc_w"].T, precision=prec) + params["mov_fc_b"]
    cat = jnp.dot(hc.reshape(B, -1), params["cat_fc_w"].T, precision=prec) + params["cat_fc_b"]
    return mov, cat


# ---------------------------------------------------------------------------
if __name__ == "__main__":
    key = jax.random.PRNGKey(0)
    kp, ks, kc = jax.random.split(key, 3)

    B, C, H, W = 2, 4, 16, 16
    HID, N_MOV, N_CAT = 8, 4, 5

    params = init_params(kp, in_channels=C, hidden_channels=HID, H=H, W=W,
                         n_mov=N_MOV, n_classes=N_CAT)
    packed = pack_params(params, H, W)          # one-time weight re-layout

    src = jax.random.normal(ks, (B, C, H, W), jnp.float32)
    canv = jax.random.normal(kc, (B, C, H, W), jnp.float32)

    roll_sign = detect_roll_sign()              # cached one-off probe kernel
    n_tc = _num_tensorcores()                   # 2 only on v7x
    chunks = n_tc if B % n_tc == 0 else 1       # 1 grid step on v5e/v6e, 2 on v7x

    fwd = jax.jit(functools.partial(combined_network_forward,
                                    n_mov=N_MOV, n_cat=N_CAT,
                                    batch_chunks=chunks, roll_sign=roll_sign))
    mov_out, cat_out = fwd(packed, src, canv)
    jax.block_until_ready((mov_out, cat_out))

    assert mov_out.shape == (B, N_MOV) and cat_out.shape == (B, N_CAT)

    # Validate against the pure-JAX (PyTorch-equivalent) reference.
    mov_ref, cat_ref = combined_network_forward_ref(params, src, canv)
    np.testing.assert_allclose(np.asarray(mov_out), np.asarray(mov_ref),
                               rtol=1e-4, atol=1e-4)
    np.testing.assert_allclose(np.asarray(cat_out), np.asarray(cat_ref),
                               rtol=1e-4, atol=1e-4)

    print("KERNEL_OK")
</pallas_src>

<mosaic_0001>
module attributes {stable_mosaic.version = 11 : i64} {
  func.func @k(%arg0: memref<8x128xf32, #tpu.memory_space<vmem>>, %arg1: memref<8x128xf32, #tpu.memory_space<vmem>>) attributes {dimension_semantics = [], scalar_prefetch = 0 : i64, scratch_operands = 0 : i64, tpu.core_type = #tpu.core_type<tc>} {
    %c0 = arith.constant 0 : index
    %c0_0 = arith.constant 0 : index
    %0 = vector.load %arg0[%c0, %c0_0] : memref<8x128xf32, #tpu.memory_space<vmem>>, vector<8x128xf32>
    %c1_i32 = arith.constant 1 : i32
    %1 = tpu.dynamic_rotate %0 by %c1_i32 dim 1 : vector<8x128xf32>, i32 -> vector<8x128xf32>
    %c0_1 = arith.constant 0 : index
    %c0_2 = arith.constant 0 : index
    %2 = vector.load %arg1[%c0_1, %c0_2] : memref<8x128xf32, #tpu.memory_space<vmem>>, vector<8x128xf32>
    tpu.vector_store %arg1[%c0_1, %c0_2], %1 {strides = array<i32>} : memref<8x128xf32, #tpu.memory_space<vmem>>, vector<8x128xf32>,
    return
  }
}

</mosaic_0001>

<llo_original>
// kernel: tpu_custom_call.1
$region0: #{tpu_custom_call.1}
  #allocation0 [shape = 'u32[]', space=smem, size = 0x4, offset = 0x4, fixed_abs, tag = 'smem constant byte address 0x4 - core index']
  #allocation1 [shape = 'u32[72,128]{1,0:T(1,128)}', space=vmem, size = 0x9000, scoped, tag = 'internal scratch']
  %s0 = inlined_call_operand.hbm [shape: f32[8,128], index: 0, kind: input, shape index: {}]
  %s1 = inlined_call_operand.hbm [shape: f32[8,128], index: 1, kind: output, shape index: {}]
  %s2 = sld [smem:[#allocation0]]
  $region18: #{tpu_custom_call.1} parent=0
    _
  %s4 = ssub.s32 1, %s2
  %s5 = scalar_select 0, %s4, %s2
  $region1: #{tpu_custom_call.1} parent=0
    #allocation2 [shape = 'u8[4096]{0}', space=vmem, size = 0x1000, scoped, tag = 'input window, operand 0, single buffered']
    #allocation3 [shape = 's32[1]{0}', space=sflag, size = 0x4, scoped, tag = 'scoped memory for tpu_custom_call.1']
    #allocation4 [shape = 's32[1]{0}', space=sflag, size = 0x4, scoped, tag = 'scoped memory for tpu_custom_call.1']
    #allocation5 [shape = 'u8[4096]{0}', space=vmem, size = 0x1000, scoped, tag = 'output window, operand 0, single buffered']
    %6 = vsyncpa [#allocation3], 0
    %7 = vsyncpa [#allocation4], 0
    // Predicated region
    $region2: #{tpu_custom_call.1} parent=1 // pred_check
      _
    $region3: #{tpu_custom_call.1} parent=1 // pred_check_branch
      %9 = sbr.rel (0) target = $region5
    $region4: #{tpu_custom_call.1} parent=1 // pred_region
      %11 = vsyncadd [#allocation3], 0
      %s13 = sshll.u32 %s0, 4
      %s14 = int_to_ptr.hbm [resolvable:$true] %s13
      %s15 = sshll.u32 [#allocation2], 4
      %s16 = int_to_ptr.vmem [resolvable:$true] %s15
      %18 = dma.hbm_to_vmem [thread:$0]  %s14, 128, %s16, [#allocation3]
    $region5: #{tpu_custom_call.1} parent=1 // pred_fallthru
      _
    // Predicated region
    $region6: #{tpu_custom_call.1} parent=1 // pred_check
      _
    $region7: #{tpu_custom_call.1} parent=1 // pred_check_branch
      %20 = sbr.rel (0) target = $region9
    $region8: #{tpu_custom_call.1} parent=1 // pred_region
      %22 = dma.done [#allocation3], 128
    $region9: #{tpu_custom_call.1} parent=1 // pred_fallthru
      _
    %v23 = vld [vmem:[#allocation2] sm:$0xff]
    %24 = vrot.lane.b32.xlu0 %v23, 1
    %v25 = vpop.permute.xlu0 %24
    %26 = vst [vmem:[#allocation5] sm:$0xff] %v25
    // Predicated region
    $region10: #{tpu_custom_call.1} parent=1 // pred_check
      _
    $region11: #{tpu_custom_call.1} parent=1 // pred_check_branch
      %28 = sbr.rel (0) target = $region13
    $region12: #{tpu_custom_call.1} parent=1 // pred_region
      %30 = vsyncadd [#allocation4], 0
      %s32 = sshll.u32 [#allocation5], 4
      %s33 = int_to_ptr.vmem [resolvable:$true] %s32
      %s34 = sshll.u32 %s1, 4
      %s35 = int_to_ptr.hbm [resolvable:$true] %s34
      %37 = dma.vmem_to_hbm [thread:$0]  %s33, 128, %s35, [#allocation4]
    $region13: #{tpu_custom_call.1} parent=1 // pred_fallthru
      _
    // Predicated region
    $region14: #{tpu_custom_call.1} parent=1 // pred_check
      _
    $region15: #{tpu_custom_call.1} parent=1 // pred_check_branch
      %39 = sbr.rel (0) target = $region17
    $region16: #{tpu_custom_call.1} parent=1 // pred_region
      %41 = dma.done [#allocation4], 128
    $region17: #{tpu_custom_call.1} parent=1 // pred_fallthru
      _
    %42 = vsyncpa [#allocation3], 1
    %43 = vsyncpa [#allocation4], 1

</llo_original>
